<compile_context>
chip_gen: v6e
topology: v6e:2x2x1
jax: 0.10.0
libtpu: 0.0.40
codegen_flags: <defaults>
</compile_context>

<pallas_src>
import functools

import jax
import jax.numpy as jnp
from jax.experimental import pallas as pl
from jax.experimental.pallas import tpu as pltpu


def _round_up(x, m):
    return (x + m - 1) // m * m


def _fc_frelu_kernel(x_ref, w_ref, b_ref, tau_ref, o_ref, acc_ref):
    """Grid = (M tiles, N tiles, K tiles); K is the (last, arbitrary) axis."""
    k = pl.program_id(2)

    @pl.when(k == 0)
    def _():
        acc_ref[...] = jnp.zeros_like(acc_ref)

    # MXU matmul in bf16 (or f32) with f32 accumulation.
    acc_ref[...] += jnp.dot(
        x_ref[...], w_ref[...], preferred_element_type=jnp.float32
    )

    # Epilogue only once, after the last K step: bias + FReLU + store.
    @pl.when(k == pl.num_programs(2) - 1)
    def _():
        y = acc_ref[...] + b_ref[...]          # (bm, bn) + (1, bn) broadcast
        y = jnp.maximum(y, tau_ref[...])       # FReLU: max(y, tau_c)
        o_ref[...] = y.astype(o_ref.dtype)


@functools.partial(
    jax.jit, static_argnames=("block_m", "block_n", "block_k", "compute_dtype")
)
def fc_frelu(x, w_t, b, tau, *, block_m=256, block_n=256, block_k=512,
             compute_dtype=jnp.bfloat16):
    """x: (B, in), w_t: (in, out) [= PyTorch weight.T], b/tau: (1, out).

    Tile defaults target v6e/v7x (256-wide MXU); pass block_m=block_n=128,
    block_k=256 for v5e-sized tiles.
    """
    B, K = x.shape
    K2, N = w_t.shape
    assert K == K2 and b.shape == (1, N) and tau.shape == (1, N)
    assert block_m % 8 == 0 and block_n % 128 == 0 and block_k % 128 == 0

    out_dtype = x.dtype

    # Clamp tiles to (padded) problem size, then pad arrays so tiles divide
    # exactly. N/K padding is with zeros -> no effect on the matmul; padded
    # output rows/cols are sliced off at the end.
    bm = min(block_m, _round_up(B, 8))
    bn = min(block_n, _round_up(N, 128))
    bk = min(block_k, _round_up(K, 128))
    Mp = _round_up(B, bm)
    Np = _round_up(N, bn)
    Kp = _round_up(K, bk)

    xp = jnp.pad(x, ((0, Mp - B), (0, Kp - K))).astype(compute_dtype)
    wp = jnp.pad(w_t, ((0, Kp - K), (0, Np - N))).astype(compute_dtype)
    bp = jnp.pad(b, ((0, 0), (0, Np - N))).astype(jnp.float32)
    taup = jnp.pad(tau, ((0, 0), (0, Np - N))).astype(jnp.float32)

    grid = (Mp // bm, Np // bn, Kp // bk)

    cost = pl.CostEstimate(
        flops=2 * Mp * Np * Kp,
        transcendentals=0,
        bytes_accessed=(
            xp.size * xp.dtype.itemsize
            + wp.size * wp.dtype.itemsize
            + Mp * Np * jnp.dtype(out_dtype).itemsize
        ),
    )

    out = pl.pallas_call(
        _fc_frelu_kernel,
        out_shape=jax.ShapeDtypeStruct((Mp, Np), out_dtype),
        grid_spec=pltpu.PrefetchScalarGridSpec(
            num_scalar_prefetch=0,
            grid=grid,
            in_specs=[
                pl.BlockSpec((bm, bk), lambda i, j, k: (i, k)),   # x tile
                pl.BlockSpec((bk, bn), lambda i, j, k: (k, j)),   # weight stripe
                pl.BlockSpec((1, bn), lambda i, j, k: (0, j)),    # bias tile
                pl.BlockSpec((1, bn), lambda i, j, k: (0, j)),    # tau tile
            ],
            out_specs=pl.BlockSpec((bm, bn), lambda i, j, k: (i, j)),
            scratch_shapes=[pltpu.VMEM((bm, bn), jnp.float32)],   # f32 accumulator
        ),
        compiler_params=pltpu.CompilerParams(
            dimension_semantics=("parallel", "parallel", "arbitrary"),
        ),
        cost_estimate=cost,
    )(xp, wp, bp, taup)

    return out[:B, :N]


def init_fc_params(key, inplanes, outplanes, dtype=jnp.float32):
    """Deterministic init mimicking nn.Linear (uniform bound 1/sqrt(in))."""
    kw, kb = jax.random.split(key)
    bound = 1.0 / (inplanes ** 0.5)
    # PyTorch stores weight as (out, in); we keep the transposed (in, out) layout.
    w_t = jax.random.uniform(kw, (inplanes, outplanes), dtype, -bound, bound)
    b = jax.random.uniform(kb, (1, outplanes), dtype, -bound, bound)
    tau = jnp.zeros((1, outplanes), dtype)  # FReLU per-channel threshold
    return w_t, b, tau


def _reference(x, w_t, b, tau, compute_dtype=jnp.bfloat16):
    # Match the kernel's bf16 input rounding, f32 accumulate.
    xc = x.astype(compute_dtype).astype(jnp.float32)
    wc = w_t.astype(compute_dtype).astype(jnp.float32)
    return jnp.maximum(xc @ wc + b, tau).astype(x.dtype)


if __name__ == "__main__":
    key = jax.random.PRNGKey(0)

    # Small case (single grid step after padding).
    k_x, k_p, k_x2, k_p2 = jax.random.split(key, 4)
    batch, inplanes, outplanes = 16, 32, 16
    x = jax.random.normal(k_x, (batch, inplanes), jnp.float32)
    w_t, b, tau = init_fc_params(k_p, inplanes, outplanes)

    out = fc_frelu(x, w_t, b, tau)
    out = jax.block_until_ready(out)
    ref = _reference(x, w_t, b, tau)
    assert out.shape == (batch, outplanes)
    assert jnp.allclose(out, ref, atol=1e-3, rtol=1e-3)

    # Slightly larger case exercising M/N/K tiling, K accumulation and padding
    # (grid = (3, 2, 3) with these small tile overrides).
    B2, K2, N2 = 96, 320, 160
    x2 = jax.random.normal(k_x2, (B2, K2), jnp.float32)
    w2, b2, tau2 = init_fc_params(k_p2, K2, N2)
    # Use a nonzero tau so the funnel max is actually exercised.
    tau2 = 0.05 * jax.random.normal(jax.random.PRNGKey(7), (1, N2), jnp.float32)

    out2 = fc_frelu(x2, w2, b2, tau2, block_m=32, block_n=128, block_k=128)
    out2 = jax.block_until_ready(out2)
    ref2 = _reference(x2, w2, b2, tau2)
    assert out2.shape == (B2, N2)
    assert jnp.allclose(out2, ref2, atol=1e-3, rtol=1e-3)

    print("KERNEL_OK")
</pallas_src>

<mosaic_0001>
module attributes {stable_mosaic.version = 11 : i64} {
  func.func @_fc_frelu_kernel(%arg0: i32, %arg1: i32, %arg2: i32, %arg3: memref<16x128xbf16, #tpu.memory_space<vmem>>, %arg4: memref<128x128xbf16, #tpu.memory_space<vmem>>, %arg5: memref<1x128xf32, #tpu.memory_space<vmem>>, %arg6: memref<1x128xf32, #tpu.memory_space<vmem>>, %arg7: memref<16x128xf32, #tpu.memory_space<vmem>>, %arg8: memref<16x128xf32, #tpu.memory_space<vmem>>) attributes {dimension_semantics = [#tpu.dimension_semantics<parallel>, #tpu.dimension_semantics<parallel>, #tpu.dimension_semantics<arbitrary>], iteration_bounds = array<i64: 1, 1, 1>, scalar_prefetch = 0 : i64, scratch_operands = 1 : i64, tpu.core_type = #tpu.core_type<tc>, window_params = [{transform_indices = @transform_0, window_bounds = array<i64: 16, 128>}, {transform_indices = @transform_1, window_bounds = array<i64: 128, 128>}, {transform_indices = @transform_2, window_bounds = array<i64: 1, 128>}, {transform_indices = @transform_3, window_bounds = array<i64: 1, 128>}, {transform_indices = @transform_4, window_bounds = array<i64: 16, 128>}]} {
    %c0_i32 = arith.constant 0 : i32
    %0 = arith.cmpi eq, %arg2, %c0_i32 : i32
    %1 = arith.extui %0 : i1 to i32
    %c0_i32_0 = arith.constant 0 : i32
    %2 = arith.cmpi ne, %1, %c0_i32_0 : i32
    scf.if %2 {
      %cst_10 = arith.constant 0.000000e+00 : f32
      %12 = vector.broadcast %cst_10 : f32 to vector<16x128xf32>
      %c0_11 = arith.constant 0 : index
      %c0_12 = arith.constant 0 : index
      %13 = vector.load %arg8[%c0_11, %c0_12] : memref<16x128xf32, #tpu.memory_space<vmem>>, vector<16x128xf32>
      tpu.vector_store %arg8[%c0_11, %c0_12], %12 {strides = array<i32>} : memref<16x128xf32, #tpu.memory_space<vmem>>, vector<16x128xf32>,
    } else {
    }
    %c0 = arith.constant 0 : index
    %c0_1 = arith.constant 0 : index
    %3 = vector.load %arg8[%c0, %c0_1] : memref<16x128xf32, #tpu.memory_space<vmem>>, vector<16x128xf32>
    %c0_2 = arith.constant 0 : index
    %c0_3 = arith.constant 0 : index
    %4 = vector.load %arg3[%c0_2, %c0_3] : memref<16x128xbf16, #tpu.memory_space<vmem>>, vector<16x128xbf16>
    %c0_4 = arith.constant 0 : index
    %c0_5 = arith.constant 0 : index
    %5 = vector.load %arg4[%c0_4, %c0_5] : memref<128x128xbf16, #tpu.memory_space<vmem>>, vector<128x128xbf16>
    %cst = arith.constant dense<0.000000e+00> : vector<16x128xf32>
    %6 = tpu.matmul %4, %5, %cst {dimension_numbers = #tpu.dot_dimension_numbers<[1], [0], [0], [1], [0, 0, 1, 1], [], []>} : vector<16x128xbf16>, vector<128x128xbf16>, vector<16x128xf32> -> vector<16x128xf32>
    %7 = arith.addf %3, %6 : vector<16x128xf32>
    %c0_6 = arith.constant 0 : index
    %c0_7 = arith.constant 0 : index
    %8 = vector.load %arg8[%c0_6, %c0_7] : memref<16x128xf32, #tpu.memory_space<vmem>>, vector<16x128xf32>
    tpu.vector_store %arg8[%c0_6, %c0_7], %7 {strides = array<i32>} : memref<16x128xf32, #tpu.memory_space<vmem>>, vector<16x128xf32>,
    %c0_i32_8 = arith.constant 0 : i32
    %9 = arith.cmpi eq, %arg2, %c0_i32_8 : i32
    %10 = arith.extui %9 : i1 to i32
    %c0_i32_9 = arith.constant 0 : i32
    %11 = arith.cmpi ne, %10, %c0_i32_9 : i32
    scf.if %11 {
      %c0_10 = arith.constant 0 : index
      %c0_11 = arith.constant 0 : index
      %12 = vector.load %arg8[%c0_10, %c0_11] : memref<16x128xf32, #tpu.memory_space<vmem>>, vector<16x128xf32>
      %c0_12 = arith.constant 0 : index
      %c0_13 = arith.constant 0 : index
      %13 = vector.load %arg5[%c0_12, %c0_13] : memref<1x128xf32, #tpu.memory_space<vmem>>, vector<1x128xf32>
      %14 = vector.broadcast %13 : vector<1x128xf32> to vector<16x128xf32>
      %15 = arith.addf %12, %14 : vector<16x128xf32>
      %c0_14 = arith.constant 0 : index
      %c0_15 = arith.constant 0 : index
      %16 = vector.load %arg6[%c0_14, %c0_15] : memref<1x128xf32, #tpu.memory_space<vmem>>, vector<1x128xf32>
      %17 = vector.broadcast %16 : vector<1x128xf32> to vector<16x128xf32>
      %18 = arith.maximumf %15, %17 : vector<16x128xf32>
      %c0_16 = arith.constant 0 : index
      %c0_17 = arith.constant 0 : index
      %19 = vector.load %arg7[%c0_16, %c0_17] : memref<16x128xf32, #tpu.memory_space<vmem>>, vector<16x128xf32>
      tpu.vector_store %arg7[%c0_16, %c0_17], %18 {strides = array<i32>} : memref<16x128xf32, #tpu.memory_space<vmem>>, vector<16x128xf32>,
    } else {
    }
    return
  }
  func.func @transform_0(%arg0: i32, %arg1: i32, %arg2: i32) -> (i32, i32) {
    %c0_i32 = arith.constant 0 : i32
    return %arg0, %arg2 : i32, i32
  }
  func.func @transform_1(%arg0: i32, %arg1: i32, %arg2: i32) -> (i32, i32) {
    %c0_i32 = arith.constant 0 : i32
    return %arg2, %arg1 : i32, i32
  }
  func.func @transform_2(%arg0: i32, %arg1: i32, %arg2: i32) -> (i32, i32) {
    %c0_i32 = arith.constant 0 : i32
    %c0_i32_0 = arith.constant 0 : i32
    return %c0_i32, %arg1 : i32, i32
  }
  func.func @transform_3(%arg0: i32, %arg1: i32, %arg2: i32) -> (i32, i32) {
    %c0_i32 = arith.constant 0 : i32
    %c0_i32_0 = arith.constant 0 : i32
    return %c0_i32, %arg1 : i32, i32
  }
  func.func @transform_4(%arg0: i32, %arg1: i32, %arg2: i32) -> (i32, i32) {
    %c0_i32 = arith.constant 0 : i32
    return %arg0, %arg1 : i32, i32
  }
}

</mosaic_0001>

<llo_original>
// kernel: fc_frelu.1
$region0: #{fc_frelu.1}
  #allocation0 [shape = 'u32[]', space=smem, size = 0x4, offset = 0x4, fixed_abs, tag = 'smem constant byte address 0x4 - core index']
  #allocation1 [shape = 'u32[144,128]{1,0:T(1,128)}', space=vmem, size = 0x12000, scoped, tag = 'internal scratch']
  #allocation2 [shape = 'f32[16,128]{1,0:T(8,128)}', space=vmem, size = 0x2000, scoped, tag = 'scratch operand']
  %s0 = inlined_call_operand.vmem [shape: bf16[16,128], index: 0, kind: input, shape index: {}]
  %s1 = inlined_call_operand.vmem [shape: bf16[128,128], index: 1, kind: input, shape index: {}]
  %s2 = inlined_call_operand.vmem [shape: f32[1,128], index: 2, kind: input, shape index: {}]
  %s3 = inlined_call_operand.vmem [shape: f32[1,128], index: 3, kind: input, shape index: {}]
  %s4 = inlined_call_operand.hbm [shape: f32[16,128], index: 4, kind: output, shape index: {}]
  %s5 = sld [smem:[#allocation0]]
  $region34: #{fc_frelu.1} parent=0
    _
  %s7 = ssub.s32 1, %s5
  %s8 = scalar_select 0, %s7, %s5
  $region1: #{fc_frelu.1} parent=0
    #allocation3 [shape = 'u8[8192]{0}', space=vmem, size = 0x2000, scoped, tag = 'output window, operand 0, single buffered']
    #allocation4 [shape = 's32[1]{0}', space=sflag, size = 0x4, scoped, tag = 'scoped memory for fc_frelu.1']
    %9 = vsyncpa [#allocation4], 0
    // Predicated region
    $region2: #{fc_frelu.1} parent=1 // pred_check
      _
    $region3: #{fc_frelu.1} parent=1 // pred_check_branch
      %11 = sbr.rel (0) target = $region5
    $region4: #{fc_frelu.1} parent=1 // pred_region
      _
    $region5: #{fc_frelu.1} parent=1 // pred_fallthru
      _
    // Predicated region
    $region6: #{fc_frelu.1} parent=1 // pred_check
      _
    $region7: #{fc_frelu.1} parent=1 // pred_check_branch
      %13 = sbr.rel (0) target = $region9
    $region8: #{fc_frelu.1} parent=1 // pred_region
      _
    $region9: #{fc_frelu.1} parent=1 // pred_fallthru
      _
    // Predicated region
    $region10: #{fc_frelu.1} parent=1 // pred_check
      _
    $region11: #{fc_frelu.1} parent=1 // pred_check_branch
      %15 = sbr.rel (0) target = $region13
    $region12: #{fc_frelu.1} parent=1 // pred_region
      _
    $region13: #{fc_frelu.1} parent=1 // pred_fallthru
      _
    // Predicated region
    $region14: #{fc_frelu.1} parent=1 // pred_check
      _
    $region15: #{fc_frelu.1} parent=1 // pred_check_branch
      %17 = sbr.rel (0) target = $region17
    $region16: #{fc_frelu.1} parent=1 // pred_region
      _
    $region17: #{fc_frelu.1} parent=1 // pred_fallthru
      _
    %p19 = scmp.eq.s32.totalorder 0, 0
    // Predicated region
    $region18: #{fc_frelu.1} parent=1 // pred_check
      %p20 = pneg %p19
    $region19: #{fc_frelu.1} parent=1 // pred_check_branch
      %22 = sbr.rel (%p20) target = $region21
    $region20: #{fc_frelu.1} parent=1 // pred_region
      %23 = vst [vmem:[#allocation2] sm:$0xff] 0.0
      %24 = vst [vmem:[#allocation2 + $0x8] sm:$0xff] 0.0
    $region21: #{fc_frelu.1} parent=1 // pred_fallthru
      _
    %v25 = vld [vmem:[#allocation2] sm:$0xff]
    %v26 = vld [vmem:[#allocation2 + $0x8] sm:$0xff]
    %v27 = vld [vmem:[%s0] sm:$0xf]
    %v28 = vld [vmem:[%s0 + $0x4] sm:$0xf]
    %v29 = vld [vmem:[%s1] sm:$0xf]
    %v30 = vld [vmem:[%s1 + $0x4] sm:$0xf]
    %v31 = vld [vmem:[%s1 + $0x8] sm:$0xf]
    %v32 = vld [vmem:[%s1 + $0xc] sm:$0xf]
    %v33 = vld [vmem:[%s1 + $0x10] sm:$0xf]
    %v34 = vld [vmem:[%s1 + $0x14] sm:$0xf]
    %v35 = vld [vmem:[%s1 + $0x18] sm:$0xf]
    %v36 = vld [vmem:[%s1 + $0x1c] sm:$0xf]
    %v37 = vld [vmem:[%s1 + $0x20] sm:$0xf]
    %v38 = vld [vmem:[%s1 + $0x24] sm:$0xf]
    %v39 = vld [vmem:[%s1 + $0x28] sm:$0xf]
    %v40 = vld [vmem:[%s1 + $0x2c] sm:$0xf]
    %v41 = vld [vmem:[%s1 + $0x30] sm:$0xf]
    %v42 = vld [vmem:[%s1 + $0x34] sm:$0xf]
    %v43 = vld [vmem:[%s1 + $0x38] sm:$0xf]
    %v44 = vld [vmem:[%s1 + $0x3c] sm:$0xf]
    %v47 = vunpack.c.l.b16 %v27
    %v48 = vunpack.c.l.b16 %v28
    %v49 = vpack.c.b16 %v48, %v47
    %v67 = vunpack.c.l.b16 %v29
    %v68 = vunpack.c.l.b16 %v30
    %v69 = vunpack.c.l.b16 %v31
    %v70 = vunpack.c.l.b16 %v32
    %v71 = vunpack.c.l.b16 %v33
    %v72 = vunpack.c.l.b16 %v34
    %v73 = vunpack.c.l.b16 %v35
    %v74 = vunpack.c.l.b16 %v36
    %v75 = vunpack.c.l.b16 %v37
    %v76 = vunpack.c.l.b16 %v38
    %v77 = vunpack.c.l.b16 %v39
    %v78 = vunpack.c.l.b16 %v40
    %v79 = vunpack.c.l.b16 %v41
    %v80 = vunpack.c.l.b16 %v42
    %v81 = vunpack.c.l.b16 %v43
    %v82 = vunpack.c.l.b16 %v44
    %v83 = vpack.c.b16 %v68, %v67
    %v84 = vpack.c.b16 %v70, %v69
    %v85 = vpack.c.b16 %v72, %v71
    %v86 = vpack.c.b16 %v74, %v73
    %v87 = vpack.c.b16 %v76, %v75
    %v88 = vpack.c.b16 %v78, %v77
    %v89 = vpack.c.b16 %v80, %v79
    %v90 = vpack.c.b16 %v82, %v81
    %99 = vmatprep.subr.bf16.mxu0 0
    %100 = vmatpush1.bf16.msra.mxu0 %v90
    %101 = vmatprep.subr.bf16.mxu0 0
    %102 = vmatpush1.bf16.msra.mxu0 %v89
    %103 = vmatprep.subr.bf16.mxu0 0
    %104 = vmatpush1.bf16.msra.mxu0 %v88
    %105 = vmatprep.subr.bf16.mxu0 0
    %106 = vmatpush1.bf16.msra.mxu0 %v87
    %107 = vmatprep.subr.bf16.mxu0 0
    %108 = vmatpush1.bf16.msra.mxu0 %v86
    %109 = vmatprep.subr.bf16.mxu0 0
    %110 = vmatpush1.bf16.msra.mxu0 %v85
    %111 = vmatprep.subr.bf16.mxu0 0
    %112 = vmatpush1.bf16.msra.mxu0 %v84
    %113 = vmatprep.subr.bf16.mxu0 0
    %114 = vmatpush1.bf16.msra.mxu0 %v83
    %115 = vmatprep.subr.bf16.mxu0 0
    %116 = vmatpush2.bf16.msra.mxu0 0
    %117 = vmatprep.subr.bf16.mxu0 0
    %118 = vmatpush2.bf16.msra.mxu0 0
    %119 = vmatprep.subr.bf16.mxu0 0
    %120 = vmatpush2.bf16.msra.mxu0 0
    %121 = vmatprep.subr.bf16.mxu0 0
    %122 = vmatpush2.bf16.msra.mxu0 0
    %123 = vmatprep.subr.bf16.mxu0 0
    %124 = vmatpush2.bf16.msra.mxu0 0
    %125 = vmatprep.subr.bf16.mxu0 0
    %126 = vmatpush2.bf16.msra.mxu0 0
    %127 = vmatprep.subr.bf16.mxu0 0
    %128 = vmatpush2.bf16.msra.mxu0 0
    %129 = vmatprep.subr.bf16.mxu0 0
    %130 = vmatpush2.bf16.msra.mxu0 0
    %131 = vmatprep.mubr.bf16.mxu0 0
    %132 = vmatmul.mubr.bf16.gmra.mxu0 %v49
    %v133 = vpop.f32.mrf.mxu0
    %v134 = vadd.f32 0.0, %v133
    %v135 = vpop.f32.mrf.mxu0
    %v136 = vpop.f32.mrf.mxu0
    %v137 = vadd.f32 0.0, %v136
    %v138 = vpop.f32.mrf.mxu0
    %139 = vdwg.mxu0
    %v140 = vadd.f32 %v25, %v134
    %v141 = vadd.f32 %v26, %v137
    %142 = vst [vmem:[#allocation2] sm:$0xff] %v140
    %143 = vst [vmem:[#allocation2 + $0x8] sm:$0xff] %v141
    // Predicated region
    $region22: #{fc_frelu.1} parent=1 // pred_check
      %p144 = pneg %p19
    $region23: #{fc_frelu.1} parent=1 // pred_check_branch
      %146 = sbr.rel (%p144) target = $region25
    $region24: #{fc_frelu.1} parent=1 // pred_region
      %v147 = vld [vmem:[#allocation2] sm:$0xff]
      %v148 = vld [vmem:[#allocation2 + $0x8] sm:$0xff]
      %v149 = vld [vmem:[%s2] sm:$0x1]
      %v151 = vlaneseq
      %v152 = vshrl.u32 %v151, 7
      %v153 = vsub.s32 0, %v152
      %v154 = vrot.slane %v149, %v153
      %v156 = vadd.f32 %v147, %v154
      %v157 = vadd.f32 %v148, %v154
      %v158 = vld [vmem:[%s3] sm:$0x1]
      %v160 = vlaneseq
      %v161 = vshrl.u32 %v160, 7
      %v162 = vsub.s32 0, %v161
      %v163 = vrot.slane %v158, %v162
      %v165 = vmax.f32 %v156, %v163
      %v166 = vmax.f32 %v157, %v163
      %167 = vst [vmem:[#allocation3] sm:$0xff] %v165
      %168 = vst [vmem:[#allocation3 + $0x8] sm:$0xff] %v166
    $region25: #{fc_frelu.1} parent=1 // pred_fallthru
      _
    // Predicated region
    $region26: #{fc_frelu.1} parent=1 // pred_check
      _
    $region27: #{fc_frelu.1} parent=1 // pred_check_branch
      %170 = sbr.rel (0) target = $region29
    $region28: #{fc_frelu.1} parent=1 // pred_region
      %s172 = ssub.s32 256, 256
      %173 = vsyncadd [#allocation4], %s172
      %s174 = sshll.u32 [#allocation3], 4
      %s175 = int_to_ptr.vmem [resolvable:$true] %s174
      %180 = dma.vmem_to_hbm [thread:$0]  %s175, 256, %s4, [#allocation4], 128, 128, 8
    $region29: #{fc_frelu.1} parent=1 // pred_fallthru
      _
    // Predicated region
    $region30: #{fc_frelu.1} parent=1 // pred_check
      _
    $region31: #{fc_frelu.1} parent=1 // pred_check_branch
      %182 = sbr.rel (0) target = $region33
    $region32: #{fc_frelu.1} parent=1 // pred_region
      %183 = dma.done [#allocation4], 256
    $region33: #{fc_frelu.1} parent=1 // pred_fallthru
      _
    %184 = vsyncpa [#allocation4], 1

</llo_original>
